<compile_context>
chip_gen: v6e
topology: v6e:2x2x1
jax: 0.10.0
libtpu: 0.0.40
codegen_flags: <defaults>
</compile_context>

<pallas_src>
import functools

import jax
import jax.numpy as jnp
import numpy as np
from jax.experimental import pallas as pl
from jax.experimental.pallas import tpu as pltpu

SIMPLE_LAYER = 64        # real feature width of the module
D_PAD = 128              # lane-padded feature width used inside the kernel
LN_EPS = 1e-5            # PyTorch nn.LayerNorm default eps


def _round_up(n, m):
    return ((n + m - 1) // m) * m


def simple_input_kernel(x_ref, w1_ref, b1_ref, w2_ref, b2_ref, g_ref, beta_ref,
                        out_ref, *, norm):
    # layer: Linear(size, 64) + ReLU     (padded to D_PAD output lanes)
    x = x_ref[...].astype(jnp.bfloat16)                       # dot operand only
    h = jnp.dot(x, w1_ref[...], preferred_element_type=jnp.float32) + b1_ref[...]
    h = jnp.maximum(h, 0.0)

    # layer2: Linear(64, 64) + ReLU
    h = jnp.dot(h.astype(jnp.bfloat16), w2_ref[...],
                preferred_element_type=jnp.float32) + b2_ref[...]
    h = jnp.maximum(h, 0.0)
    # Padded lanes (>= SIMPLE_LAYER) are exactly zero here: padded weight
    # columns / bias entries are zero and ReLU(0) == 0.

    if norm:
        # LayerNorm over the 64 real lanes only (mask out the zero padding).
        lane = jax.lax.broadcasted_iota(jnp.int32, h.shape, 1)
        mask = (lane < SIMPLE_LAYER).astype(jnp.float32)
        inv_n = 1.0 / SIMPLE_LAYER
        mu = jnp.sum(h * mask, axis=-1, keepdims=True) * inv_n
        diff = (h - mu) * mask
        var = jnp.sum(diff * diff, axis=-1, keepdims=True) * inv_n
        h = diff * jax.lax.rsqrt(var + LN_EPS) * g_ref[...] + beta_ref[...]

    out_ref[...] = h.astype(out_ref.dtype)


def simple_input_pallas(x, params, *, in_shape, norm=True, batch_tile=None):
    """Pallas equivalent of SimpleInput.forward(x, norm)."""
    w1, b1, w2, b2, gamma, beta = params
    cut = len(in_shape)
    size = int(np.prod(in_shape))
    lead = x.shape[:-cut]
    B = int(np.prod(lead)) if len(lead) else 1
    D = SIMPLE_LAYER

    x2 = jnp.asarray(x, jnp.float32).reshape(B, size)   # x.view(s).float()

    # Lane-dense padding of the contraction dim and batch dim.
    size_p = _round_up(max(size, 128), 128)
    if batch_tile is None:
        batch_tile = min(_round_up(B, 8), 256)
    batch_tile = _round_up(batch_tile, 8)
    B_p = _round_up(B, batch_tile)

    x_p = jnp.zeros((B_p, size_p), jnp.float32).at[:B, :size].set(x2)

    # Zero-padded params: weights in bf16 (MXU), biases / LN params in f32.
    w1_p = jnp.zeros((size_p, D_PAD), jnp.float32).at[:size, :D].set(w1).astype(jnp.bfloat16)
    w2_p = jnp.zeros((D_PAD, D_PAD), jnp.float32).at[:D, :D].set(w2).astype(jnp.bfloat16)
    b1_p = jnp.zeros((1, D_PAD), jnp.float32).at[0, :D].set(b1)
    b2_p = jnp.zeros((1, D_PAD), jnp.float32).at[0, :D].set(b2)
    g_p = jnp.zeros((1, D_PAD), jnp.float32).at[0, :D].set(gamma)
    be_p = jnp.zeros((1, D_PAD), jnp.float32).at[0, :D].set(beta)

    grid = (B_p // batch_tile,)

    def full_spec(shape):
        # Resident parameter block: same (zero) block index for every step.
        return pl.BlockSpec(shape, lambda i, _z=(0,) * len(shape): _z)

    out_p = pl.pallas_call(
        functools.partial(simple_input_kernel, norm=norm),
        out_shape=jax.ShapeDtypeStruct((B_p, D_PAD), jnp.float32),
        grid_spec=pltpu.PrefetchScalarGridSpec(
            num_scalar_prefetch=0,
            grid=grid,
            in_specs=[
                pl.BlockSpec((batch_tile, size_p), lambda i: (i, 0)),  # x
                full_spec((size_p, D_PAD)),                            # w1
                full_spec((1, D_PAD)),                                 # b1
                full_spec((D_PAD, D_PAD)),                             # w2
                full_spec((1, D_PAD)),                                 # b2
                full_spec((1, D_PAD)),                                 # gamma
                full_spec((1, D_PAD)),                                 # beta
            ],
            out_specs=pl.BlockSpec((batch_tile, D_PAD), lambda i: (i, 0)),
        ),
        compiler_params=pltpu.CompilerParams(
            dimension_semantics=("parallel",)),   # batch axis shards across TCs
    )(x_p, w1_p, b1_p, w2_p, b2_p, g_p, be_p)

    out = out_p[:B, :D]
    return out.reshape(tuple(lead) + (D,))


def init_params(key, size):
    """Deterministic synthetic init, PyTorch-Linear-like uniform scaling."""
    D = SIMPLE_LAYER

    def linear(k, fan_in, fan_out):
        kw, kb = jax.random.split(k)
        bound = 1.0 / np.sqrt(fan_in)
        w = jax.random.uniform(kw, (fan_in, fan_out), jnp.float32, -bound, bound)
        b = jax.random.uniform(kb, (fan_out,), jnp.float32, -bound, bound)
        return w, b

    k1, k2 = jax.random.split(key)
    w1, b1 = linear(k1, size, D)
    w2, b2 = linear(k2, D, D)
    gamma = jnp.ones((D,), jnp.float32)   # PyTorch LayerNorm defaults
    beta = jnp.zeros((D,), jnp.float32)
    return (w1, b1, w2, b2, gamma, beta)


def simple_input_ref(x, params, *, in_shape, norm=True):
    """Pure-JAX f32 reference of the PyTorch forward pass."""
    w1, b1, w2, b2, gamma, beta = params
    cut = len(in_shape)
    size = int(np.prod(in_shape))
    lead = x.shape[:-cut]
    h = jnp.asarray(x, jnp.float32).reshape(tuple(lead) + (size,))
    h = jnp.maximum(h @ w1 + b1, 0.0)
    h = jnp.maximum(h @ w2 + b2, 0.0)
    if norm:
        mu = jnp.mean(h, axis=-1, keepdims=True)
        var = jnp.mean((h - mu) ** 2, axis=-1, keepdims=True)
        h = (h - mu) * jax.lax.rsqrt(var + LN_EPS) * gamma + beta
    return h


if __name__ == "__main__":
    IN_SHAPE = (4, 8, 8)     # flattened size = 256
    LEAD = (2, 4)            # leading batch dims -> 8 rows total

    key = jax.random.PRNGKey(0)
    kx, kp = jax.random.split(key)
    x = jax.random.normal(kx, LEAD + IN_SHAPE, jnp.float32)
    params = init_params(kp, int(np.prod(IN_SHAPE)))

    # norm=True path
    out = jax.block_until_ready(
        simple_input_pallas(x, params, in_shape=IN_SHAPE, norm=True))
    ref = jax.block_until_ready(
        simple_input_ref(x, params, in_shape=IN_SHAPE, norm=True))
    assert out.shape == LEAD + (SIMPLE_LAYER,)
    # bf16 dot operands vs f32 reference -> slightly loose tolerance
    np.testing.assert_allclose(np.asarray(out), np.asarray(ref),
                               rtol=5e-2, atol=5e-2)

    # norm=False path
    out_nn = jax.block_until_ready(
        simple_input_pallas(x, params, in_shape=IN_SHAPE, norm=False))
    ref_nn = jax.block_until_ready(
        simple_input_ref(x, params, in_shape=IN_SHAPE, norm=False))
    np.testing.assert_allclose(np.asarray(out_nn), np.asarray(ref_nn),
                               rtol=5e-2, atol=5e-2)

    print("KERNEL_OK")
</pallas_src>

<mosaic_0001>
module attributes {stable_mosaic.version = 11 : i64} {
  func.func @simple_input_kernel(%arg0: i32, %arg1: memref<8x256xf32, #tpu.memory_space<vmem>>, %arg2: memref<256x128xbf16, #tpu.memory_space<vmem>>, %arg3: memref<1x128xf32, #tpu.memory_space<vmem>>, %arg4: memref<128x128xbf16, #tpu.memory_space<vmem>>, %arg5: memref<1x128xf32, #tpu.memory_space<vmem>>, %arg6: memref<1x128xf32, #tpu.memory_space<vmem>>, %arg7: memref<1x128xf32, #tpu.memory_space<vmem>>, %arg8: memref<8x128xf32, #tpu.memory_space<vmem>>) attributes {dimension_semantics = [#tpu.dimension_semantics<parallel>], iteration_bounds = array<i64: 1>, scalar_prefetch = 0 : i64, scratch_operands = 0 : i64, tpu.core_type = #tpu.core_type<tc>, window_params = [{transform_indices = @transform_0, window_bounds = array<i64: 8, 256>}, {pipeline_mode = #tpu.pipeline_mode<synchronous>, transform_indices = @transform_1, window_bounds = array<i64: 256, 128>}, {pipeline_mode = #tpu.pipeline_mode<synchronous>, transform_indices = @transform_2, window_bounds = array<i64: 1, 128>}, {pipeline_mode = #tpu.pipeline_mode<synchronous>, transform_indices = @transform_3, window_bounds = array<i64: 128, 128>}, {pipeline_mode = #tpu.pipeline_mode<synchronous>, transform_indices = @transform_4, window_bounds = array<i64: 1, 128>}, {pipeline_mode = #tpu.pipeline_mode<synchronous>, transform_indices = @transform_5, window_bounds = array<i64: 1, 128>}, {pipeline_mode = #tpu.pipeline_mode<synchronous>, transform_indices = @transform_6, window_bounds = array<i64: 1, 128>}, {transform_indices = @transform_7, window_bounds = array<i64: 8, 128>}]} {
    %c0 = arith.constant 0 : index
    %c0_0 = arith.constant 0 : index
    %0 = vector.load %arg1[%c0, %c0_0] : memref<8x256xf32, #tpu.memory_space<vmem>>, vector<8x256xf32>
    %1 = arith.truncf %0 : vector<8x256xf32> to vector<8x256xbf16>
    %c0_1 = arith.constant 0 : index
    %c0_2 = arith.constant 0 : index
    %2 = vector.load %arg2[%c0_1, %c0_2] : memref<256x128xbf16, #tpu.memory_space<vmem>>, vector<256x128xbf16>
    %cst = arith.constant dense<0.000000e+00> : vector<8x128xf32>
    %3 = tpu.matmul %1, %2, %cst {dimension_numbers = #tpu.dot_dimension_numbers<[1], [0], [0], [1], [0, 0, 1, 1], [], []>} : vector<8x256xbf16>, vector<256x128xbf16>, vector<8x128xf32> -> vector<8x128xf32>
    %c0_3 = arith.constant 0 : index
    %c0_4 = arith.constant 0 : index
    %4 = vector.load %arg3[%c0_3, %c0_4] : memref<1x128xf32, #tpu.memory_space<vmem>>, vector<1x128xf32>
    %5 = vector.broadcast %4 : vector<1x128xf32> to vector<8x128xf32>
    %6 = arith.addf %3, %5 : vector<8x128xf32>
    %cst_5 = arith.constant 0.000000e+00 : f32
    %7 = vector.broadcast %cst_5 : f32 to vector<8x128xf32>
    %8 = arith.maximumf %6, %7 : vector<8x128xf32>
    %9 = arith.truncf %8 : vector<8x128xf32> to vector<8x128xbf16>
    %c0_6 = arith.constant 0 : index
    %c0_7 = arith.constant 0 : index
    %10 = vector.load %arg4[%c0_6, %c0_7] : memref<128x128xbf16, #tpu.memory_space<vmem>>, vector<128x128xbf16>
    %cst_8 = arith.constant dense<0.000000e+00> : vector<8x128xf32>
    %11 = tpu.matmul %9, %10, %cst_8 {dimension_numbers = #tpu.dot_dimension_numbers<[1], [0], [0], [1], [0, 0, 1, 1], [], []>} : vector<8x128xbf16>, vector<128x128xbf16>, vector<8x128xf32> -> vector<8x128xf32>
    %c0_9 = arith.constant 0 : index
    %c0_10 = arith.constant 0 : index
    %12 = vector.load %arg5[%c0_9, %c0_10] : memref<1x128xf32, #tpu.memory_space<vmem>>, vector<1x128xf32>
    %13 = vector.broadcast %12 : vector<1x128xf32> to vector<8x128xf32>
    %14 = arith.addf %11, %13 : vector<8x128xf32>
    %cst_11 = arith.constant 0.000000e+00 : f32
    %15 = vector.broadcast %cst_11 : f32 to vector<8x128xf32>
    %16 = arith.maximumf %14, %15 : vector<8x128xf32>
    %17 = tpu.iota {dimensions = array<i32: 1>} : vector<8x128xi32>
    %c64_i32 = arith.constant 64 : i32
    %18 = vector.broadcast %c64_i32 : i32 to vector<8x128xi32>
    %19 = arith.cmpi slt, %17, %18 : vector<8x128xi32>
    %20 = arith.extui %19 : vector<8x128xi1> to vector<8x128xi32>
    %21 = arith.sitofp %20 : vector<8x128xi32> to vector<8x128xf32>
    %22 = arith.mulf %16, %21 : vector<8x128xf32>
    %cst_12 = arith.constant dense<0.000000e+00> : vector<8xf32>
    %23 = vector.multi_reduction <add>, %22, %cst_12 [1] : vector<8x128xf32> to vector<8xf32>
    %24 = vector.shape_cast %23 : vector<8xf32> to vector<8x1xf32>
    %cst_13 = arith.constant 1.562500e-02 : f32
    %25 = vector.broadcast %cst_13 : f32 to vector<8x1xf32>
    %26 = arith.mulf %24, %25 : vector<8x1xf32>
    %27 = vector.broadcast %26 : vector<8x1xf32> to vector<8x128xf32>
    %28 = arith.subf %16, %27 : vector<8x128xf32>
    %29 = arith.mulf %28, %21 : vector<8x128xf32>
    %30 = arith.mulf %29, %29 : vector<8x128xf32>
    %cst_14 = arith.constant dense<0.000000e+00> : vector<8xf32>
    %31 = vector.multi_reduction <add>, %30, %cst_14 [1] : vector<8x128xf32> to vector<8xf32>
    %32 = vector.shape_cast %31 : vector<8xf32> to vector<8x1xf32>
    %cst_15 = arith.constant 1.562500e-02 : f32
    %33 = vector.broadcast %cst_15 : f32 to vector<8x1xf32>
    %34 = arith.mulf %32, %33 : vector<8x1xf32>
    %cst_16 = arith.constant 9.99999974E-6 : f32
    %35 = vector.broadcast %cst_16 : f32 to vector<8x1xf32>
    %36 = arith.addf %34, %35 : vector<8x1xf32>
    %37 = math.rsqrt %36 : vector<8x1xf32>
    %38 = vector.broadcast %37 : vector<8x1xf32> to vector<8x128xf32>
    %39 = arith.mulf %29, %38 : vector<8x128xf32>
    %c0_17 = arith.constant 0 : index
    %c0_18 = arith.constant 0 : index
    %40 = vector.load %arg6[%c0_17, %c0_18] : memref<1x128xf32, #tpu.memory_space<vmem>>, vector<1x128xf32>
    %41 = vector.broadcast %40 : vector<1x128xf32> to vector<8x128xf32>
    %42 = arith.mulf %39, %41 : vector<8x128xf32>
    %c0_19 = arith.constant 0 : index
    %c0_20 = arith.constant 0 : index
    %43 = vector.load %arg7[%c0_19, %c0_20] : memref<1x128xf32, #tpu.memory_space<vmem>>, vector<1x128xf32>
    %44 = vector.broadcast %43 : vector<1x128xf32> to vector<8x128xf32>
    %45 = arith.addf %42, %44 : vector<8x128xf32>
    %c0_21 = arith.constant 0 : index
    %c0_22 = arith.constant 0 : index
    %46 = vector.load %arg8[%c0_21, %c0_22] : memref<8x128xf32, #tpu.memory_space<vmem>>, vector<8x128xf32>
    tpu.vector_store %arg8[%c0_21, %c0_22], %45 {strides = array<i32>} : memref<8x128xf32, #tpu.memory_space<vmem>>, vector<8x128xf32>,
    return
  }
  func.func @transform_0(%arg0: i32) -> (i32, i32) {
    %c0_i32 = arith.constant 0 : i32
    %c0_i32_0 = arith.constant 0 : i32
    return %arg0, %c0_i32 : i32, i32
  }
  func.func @transform_1(%arg0: i32) -> (i32, i32) {
    %c0_i32 = arith.constant 0 : i32
    %c0_i32_0 = arith.constant 0 : i32
    %c0_i32_1 = arith.constant 0 : i32
    return %c0_i32, %c0_i32_0 : i32, i32
  }
  func.func @transform_2(%arg0: i32) -> (i32, i32) {
    %c0_i32 = arith.constant 0 : i32
    %c0_i32_0 = arith.constant 0 : i32
    %c0_i32_1 = arith.constant 0 : i32
    return %c0_i32, %c0_i32_0 : i32, i32
  }
  func.func @transform_3(%arg0: i32) -> (i32, i32) {
    %c0_i32 = arith.constant 0 : i32
    %c0_i32_0 = arith.constant 0 : i32
    %c0_i32_1 = arith.constant 0 : i32
    return %c0_i32, %c0_i32_0 : i32, i32
  }
  func.func @transform_4(%arg0: i32) -> (i32, i32) {
    %c0_i32 = arith.constant 0 : i32
    %c0_i32_0 = arith.constant 0 : i32
    %c0_i32_1 = arith.constant 0 : i32
    return %c0_i32, %c0_i32_0 : i32, i32
  }
  func.func @transform_5(%arg0: i32) -> (i32, i32) {
    %c0_i32 = arith.constant 0 : i32
    %c0_i32_0 = arith.constant 0 : i32
    %c0_i32_1 = arith.constant 0 : i32
    return %c0_i32, %c0_i32_0 : i32, i32
  }
  func.func @transform_6(%arg0: i32) -> (i32, i32) {
    %c0_i32 = arith.constant 0 : i32
    %c0_i32_0 = arith.constant 0 : i32
    %c0_i32_1 = arith.constant 0 : i32
    return %c0_i32, %c0_i32_0 : i32, i32
  }
  func.func @transform_7(%arg0: i32) -> (i32, i32) {
    %c0_i32 = arith.constant 0 : i32
    %c0_i32_0 = arith.constant 0 : i32
    return %arg0, %c0_i32 : i32, i32
  }
}

</mosaic_0001>

<llo_original>
// kernel: tpu_custom_call.1
$region0: #{tpu_custom_call.1}
  #allocation0 [shape = 'u32[]', space=smem, size = 0x4, offset = 0x4, fixed_abs, tag = 'smem constant byte address 0x4 - core index']
  #allocation1 [shape = 'u32[144,128]{1,0:T(1,128)}', space=vmem, size = 0x12000, scoped, tag = 'internal scratch']
  %s0 = inlined_call_operand.hbm [shape: f32[8,256], index: 0, kind: input, shape index: {}]
  %s1 = inlined_call_operand.hbm [shape: bf16[256,128], index: 1, kind: input, shape index: {}]
  %s2 = inlined_call_operand.vmem [shape: f32[1,128], index: 2, kind: input, shape index: {}]
  %s3 = inlined_call_operand.hbm [shape: bf16[128,128], index: 3, kind: input, shape index: {}]
  %s4 = inlined_call_operand.vmem [shape: f32[1,128], index: 4, kind: input, shape index: {}]
  %s5 = inlined_call_operand.vmem [shape: f32[1,128], index: 5, kind: input, shape index: {}]
  %s6 = inlined_call_operand.vmem [shape: f32[1,128], index: 6, kind: input, shape index: {}]
  %s7 = inlined_call_operand.hbm [shape: f32[8,128], index: 7, kind: output, shape index: {}]
  %s8 = sld [smem:[#allocation0]]
  $region50: #{tpu_custom_call.1} parent=0
    _
  %s10 = ssub.s32 1, %s8
  %s11 = scalar_select 0, %s10, %s8
  $region1: #{tpu_custom_call.1} parent=0
    #allocation2 [shape = 'u8[8192]{0}', space=vmem, size = 0x2000, scoped, tag = 'input window, operand 0, single buffered']
    #allocation3 [shape = 's32[1]{0}', space=sflag, size = 0x4, scoped, tag = 'scoped memory for tpu_custom_call.1']
    #allocation4 [shape = 's32[1]{0}', space=sflag, size = 0x4, scoped, tag = 'scoped memory for tpu_custom_call.1']
    #allocation5 [shape = 'u8[65536]{0}', space=vmem, size = 0x10000, scoped, tag = 'input window, operand 1, single buffered']
    #allocation6 [shape = 's32[1]{0}', space=sflag, size = 0x4, scoped, tag = 'scoped memory for tpu_custom_call.1']
    #allocation7 [shape = 'u8[32768]{0}', space=vmem, size = 0x8000, scoped, tag = 'input window, operand 3, single buffered']
    #allocation8 [shape = 'u8[4096]{0}', space=vmem, size = 0x1000, scoped, tag = 'output window, operand 0, single buffered']
    %12 = vsyncpa [#allocation3], 0
    %13 = vsyncpa [#allocation6], 0
    %14 = vsyncpa [#allocation4], 0
    // Predicated region
    $region2: #{tpu_custom_call.1} parent=1 // pred_check
      _
    $region3: #{tpu_custom_call.1} parent=1 // pred_check_branch
      %16 = sbr.rel (0) target = $region5
    $region4: #{tpu_custom_call.1} parent=1 // pred_region
      %s18 = ssub.s32 256, 256
      %19 = vsyncadd [#allocation3], %s18
      %s21 = sshll.u32 [#allocation2], 4
      %s22 = int_to_ptr.vmem [resolvable:$true] %s21
      %24 = dma.hbm_to_vmem [thread:$0]  %s0, 256, %s22, [#allocation3]
    $region5: #{tpu_custom_call.1} parent=1 // pred_fallthru
      _
    // Predicated region
    $region6: #{tpu_custom_call.1} parent=1 // pred_check
      _
    $region7: #{tpu_custom_call.1} parent=1 // pred_check_branch
      %26 = sbr.rel (0) target = $region9
    $region8: #{tpu_custom_call.1} parent=1 // pred_region
      %s28 = ssub.s32 2048, 2048
      %29 = vsyncadd [#allocation6], %s28
      %s30 = sshll.u32 [#allocation5], 4
      %s31 = int_to_ptr.vmem [resolvable:$true] %s30
      %36 = dma.hbm_to_vmem [thread:$0]  %s1, 2048, %s31, [#allocation6], 64, 64, 4
    $region9: #{tpu_custom_call.1} parent=1 // pred_fallthru
      _
    // Predicated region
    $region10: #{tpu_custom_call.1} parent=1 // pred_check
      _
    $region11: #{tpu_custom_call.1} parent=1 // pred_check_branch
      %38 = sbr.rel (0) target = $region13
    $region12: #{tpu_custom_call.1} parent=1 // pred_region
      _
    $region13: #{tpu_custom_call.1} parent=1 // pred_fallthru
      _
    // Predicated region
    $region14: #{tpu_custom_call.1} parent=1 // pred_check
      _
    $region15: #{tpu_custom_call.1} parent=1 // pred_check_branch
      %40 = sbr.rel (0) target = $region17
    $region16: #{tpu_custom_call.1} parent=1 // pred_region
      %s42 = ssub.s32 1024, 1024
      %43 = vsyncadd [#allocation6], %s42
      %s44 = sshll.u32 [#allocation7], 4
      %s45 = int_to_ptr.vmem [resolvable:$true] %s44
      %50 = dma.hbm_to_vmem [thread:$0]  %s3, 1024, %s45, [#allocation6], 64, 64, 4
    $region17: #{tpu_custom_call.1} parent=1 // pred_fallthru
      _
    // Predicated region
    $region18: #{tpu_custom_call.1} parent=1 // pred_check
      _
    $region19: #{tpu_custom_call.1} parent=1 // pred_check_branch
      %52 = sbr.rel (0) target = $region21
    $region20: #{tpu_custom_call.1} parent=1 // pred_region
      _
    $region21: #{tpu_custom_call.1} parent=1 // pred_fallthru
      _
    // Predicated region
    $region22: #{tpu_custom_call.1} parent=1 // pred_check
      _
    $region23: #{tpu_custom_call.1} parent=1 // pred_check_branch
      %54 = sbr.rel (0) target = $region25
    $region24: #{tpu_custom_call.1} parent=1 // pred_region
      _
    $region25: #{tpu_custom_call.1} parent=1 // pred_fallthru
      _
    // Predicated region
    $region26: #{tpu_custom_call.1} parent=1 // pred_check
      _
    $region27: #{tpu_custom_call.1} parent=1 // pred_check_branch
      %56 = sbr.rel (0) target = $region29
    $region28: #{tpu_custom_call.1} parent=1 // pred_region
      _
    $region29: #{tpu_custom_call.1} parent=1 // pred_fallthru
      _
    // Predicated region
    $region30: #{tpu_custom_call.1} parent=1 // pred_check
      _
    $region31: #{tpu_custom_call.1} parent=1 // pred_check_branch
      %58 = sbr.rel (0) target = $region33
    $region32: #{tpu_custom_call.1} parent=1 // pred_region
      %59 = dma.done [#allocation3], 256
    $region33: #{tpu_custom_call.1} parent=1 // pred_fallthru
      _
    // Predicated region
    $region34: #{tpu_custom_call.1} parent=1 // pred_check
      _
    $region35: #{tpu_custom_call.1} parent=1 // pred_check_branch
      %61 = sbr.rel (0) target = $region37
    $region36: #{tpu_custom_call.1} parent=1 // pred_region
      %62 = dma.done [#allocation6], 2048
    $region37: #{tpu_custom_call.1} parent=1 // pred_fallthru
      _
    // Predicated region
    $region38: #{tpu_custom_call.1} parent=1 // pred_check
      _
    $region39: #{tpu_custom_call.1} parent=1 // pred_check_branch
      %64 = sbr.rel (0) target = $region41
    $region40: #{tpu_custom_call.1} parent=1 // pred_region
      %65 = dma.done [#allocation6], 1024
    $region41: #{tpu_custom_call.1} parent=1 // pred_fallthru
      _
    %v67 = vld [vmem:[#allocation2] sm:$0xff]
    %v68 = vld [vmem:[#allocation2 + $0x8] sm:$0xff]
    %v69 = vpack.c.bf16 %v67, %v67
    %v70 = vpack.c.bf16 %v68, %v68
    %v71 = vld [vmem:[#allocation5] sm:$0xf]
    %v72 = vld [vmem:[#allocation5 + $0x4] sm:$0xf]
    %v73 = vld [vmem:[#allocation5 + $0x8] sm:$0xf]
    %v74 = vld [vmem:[#allocation5 + $0xc] sm:$0xf]
    %v75 = vld [vmem:[#allocation5 + $0x10] sm:$0xf]
    %v76 = vld [vmem:[#allocation5 + $0x14] sm:$0xf]
    %v77 = vld [vmem:[#allocation5 + $0x18] sm:$0xf]
    %v78 = vld [vmem:[#allocation5 + $0x1c] sm:$0xf]
    %v79 = vld [vmem:[#allocation5 + $0x20] sm:$0xf]
    %v80 = vld [vmem:[#allocation5 + $0x24] sm:$0xf]
    %v81 = vld [vmem:[#allocation5 + $0x28] sm:$0xf]
    %v82 = vld [vmem:[#allocation5 + $0x2c] sm:$0xf]
    %v83 = vld [vmem:[#allocation5 + $0x30] sm:$0xf]
    %v84 = vld [vmem:[#allocation5 + $0x34] sm:$0xf]
    %v85 = vld [vmem:[#allocation5 + $0x38] sm:$0xf]
    %v86 = vld [vmem:[#allocation5 + $0x3c] sm:$0xf]
    %v87 = vld [vmem:[#allocation5 + $0x40] sm:$0xf]
    %v88 = vld [vmem:[#allocation5 + $0x44] sm:$0xf]
    %v89 = vld [vmem:[#allocation5 + $0x48] sm:$0xf]
    %v90 = vld [vmem:[#allocation5 + $0x4c] sm:$0xf]
    %v91 = vld [vmem:[#allocation5 + $0x50] sm:$0xf]
    %v92 = vld [vmem:[#allocation5 + $0x54] sm:$0xf]
    %v93 = vld [vmem:[#allocation5 + $0x58] sm:$0xf]
    %v94 = vld [vmem:[#allocation5 + $0x5c] sm:$0xf]
    %v95 = vld [vmem:[#allocation5 + $0x60] sm:$0xf]
    %v96 = vld [vmem:[#allocation5 + $0x64] sm:$0xf]
    %v97 = vld [vmem:[#allocation5 + $0x68] sm:$0xf]
    %v98 = vld [vmem:[#allocation5 + $0x6c] sm:$0xf]
    %v99 = vld [vmem:[#allocation5 + $0x70] sm:$0xf]
    %v100 = vld [vmem:[#allocation5 + $0x74] sm:$0xf]
    %v101 = vld [vmem:[#allocation5 + $0x78] sm:$0xf]
    %v102 = vld [vmem:[#allocation5 + $0x7c] sm:$0xf]
    %v103 = vld [vmem:[%s2] sm:$0x1]
    %v105 = vlaneseq
    %v106 = vshrl.u32 %v105, 7
    %v107 = vsub.s32 0, %v106
    %v108 = vrot.slane %v103, %v107
    %v142 = vunpack.c.l.b16 %v71
    %v143 = vunpack.c.l.b16 %v72
    %v144 = vunpack.c.l.b16 %v73
    %v145 = vunpack.c.l.b16 %v74
    %v146 = vunpack.c.l.b16 %v75
    %v147 = vunpack.c.l.b16 %v76
    %v148 = vunpack.c.l.b16 %v77
    %v149 = vunpack.c.l.b16 %v78
    %v150 = vunpack.c.l.b16 %v79
    %v151 = vunpack.c.l.b16 %v80
    %v152 = vunpack.c.l.b16 %v81
    %v153 = vunpack.c.l.b16 %v82
    %v154 = vunpack.c.l.b16 %v83
    %v155 = vunpack.c.l.b16 %v84
    %v156 = vunpack.c.l.b16 %v85
    %v157 = vunpack.c.l.b16 %v86
    %v158 = vunpack.c.l.b16 %v87
    %v159 = vunpack.c.l.b16 %v88
    %v160 = vunpack.c.l.b16 %v89
    %v161 = vunpack.c.l.b16 %v90
    %v162 = vunpack.c.l.b16 %v91
    %v163 = vunpack.c.l.b16 %v92
    %v164 = vunpack.c.l.b16 %v93
    %v165 = vunpack.c.l.b16 %v94
    %v166 = vunpack.c.l.b16 %v95
    %v167 = vunpack.c.l.b16 %v96
    %v168 = vunpack.c.l.b16 %v97
    %v169 = vunpack.c.l.b16 %v98
    %v170 = vunpack.c.l.b16 %v99
    %v171 = vunpack.c.l.b16 %v100
    %v172 = vunpack.c.l.b16 %v101
    %v173 = vunpack.c.l.b16 %v102
    %v174 = vpack.c.b16 %v143, %v142
    %v175 = vpack.c.b16 %v145, %v144
    %v176 = vpack.c.b16 %v147, %v146
    %v177 = vpack.c.b16 %v149, %v148
    %v178 = vpack.c.b16 %v151, %v150
    %v179 = vpack.c.b16 %v153, %v152
    %v180 = vpack.c.b16 %v155, %v154
    %v181 = vpack.c.b16 %v157, %v156
    %v182 = vpack.c.b16 %v159, %v158
    %v183 = vpack.c.b16 %v161, %v160
    %v184 = vpack.c.b16 %v163, %v162
    %v185 = vpack.c.b16 %v165, %v164
    %v186 = vpack.c.b16 %v167, %v166
    %v187 = vpack.c.b16 %v169, %v168
    %v188 = vpack.c.b16 %v171, %v170
    %v189 = vpack.c.b16 %v173, %v172
    %206 = vmatprep.subr.bf16.mxu0 0
    %207 = vmatpush1.bf16.msra.mxu0 %v181
    %208 = vmatprep.subr.bf16.mxu0 0
    %209 = vmatpush1.bf16.msra.mxu0 %v180
    %210 = vmatprep.subr.bf16.mxu0 0
    %211 = vmatpush1.bf16.msra.mxu0 %v179
    %212 = vmatprep.subr.bf16.mxu0 0
    %213 = vmatpush1.bf16.msra.mxu0 %v178
    %214 = vmatprep.subr.bf16.mxu0 0
    %215 = vmatpush1.bf16.msra.mxu0 %v177
    %216 = vmatprep.subr.bf16.mxu0 0
    %217 = vmatpush1.bf16.msra.mxu0 %v176
    %218 = vmatprep.subr.bf16.mxu0 0
    %219 = vmatpush1.bf16.msra.mxu0 %v175
    %220 = vmatprep.subr.bf16.mxu0 0
    %221 = vmatpush1.bf16.msra.mxu0 %v174
    %222 = vmatprep.subr.bf16.mxu0 0
    %223 = vmatpush2.bf16.msra.mxu0 %v189
    %224 = vmatprep.subr.bf16.mxu0 0
    %225 = vmatpush2.bf16.msra.mxu0 %v188
    %226 = vmatprep.subr.bf16.mxu0 0
    %227 = vmatpush2.bf16.msra.mxu0 %v187
    %228 = vmatprep.subr.bf16.mxu0 0
    %229 = vmatpush2.bf16.msra.mxu0 %v186
    %230 = vmatprep.subr.bf16.mxu0 0
    %231 = vmatpush2.bf16.msra.mxu0 %v185
    %232 = vmatprep.subr.bf16.mxu0 0
    %233 = vmatpush2.bf16.msra.mxu0 %v184
    %234 = vmatprep.subr.bf16.mxu0 0
    %235 = vmatpush2.bf16.msra.mxu0 %v183
    %236 = vmatprep.subr.bf16.mxu0 0
    %237 = vmatpush2.bf16.msra.mxu0 %v182
    %238 = vmatprep.mubr.bf16.mxu0 %v70
    %239 = vmatmul.mubr.bf16.gmra.mxu0 %v69
    %v240 = vpop.f32.mrf.mxu0
    %v241 = vadd.f32 %v108, %v240
    %v242 = vpop.f32.mrf.mxu0
    %v243 = vpop.f32.mrf.mxu0
    %v244 = vpop.f32.mrf.mxu0
    %245 = vdwg.mxu0
    %v246 = vmax.f32 %v241, 0.0
    %v247 = vpack.c.bf16 %v246, %v246
    %v248 = vld [vmem:[#allocation7] sm:$0xf]
    %v249 = vld [vmem:[#allocation7 + $0x4] sm:$0xf]
    %v250 = vld [vmem:[#allocation7 + $0x8] sm:$0xf]
    %v251 = vld [vmem:[#allocation7 + $0xc] sm:$0xf]
    %v252 = vld [vmem:[#allocation7 + $0x10] sm:$0xf]
    %v253 = vld [vmem:[#allocation7 + $0x14] sm:$0xf]
    %v254 = vld [vmem:[#allocation7 + $0x18] sm:$0xf]
    %v255 = vld [vmem:[#allocation7 + $0x1c] sm:$0xf]
    %v256 = vld [vmem:[#allocation7 + $0x20] sm:$0xf]
    %v257 = vld [vmem:[#allocation7 + $0x24] sm:$0xf]
    %v258 = vld [vmem:[#allocation7 + $0x28] sm:$0xf]
    %v259 = vld [vmem:[#allocation7 + $0x2c] sm:$0xf]
    %v260 = vld [vmem:[#allocation7 + $0x30] sm:$0xf]
    %v261 = vld [vmem:[#allocation7 + $0x34] sm:$0xf]
    %v262 = vld [vmem:[#allocation7 + $0x38] sm:$0xf]
    %v263 = vld [vmem:[#allocation7 + $0x3c] sm:$0xf]
    %v264 = vld [vmem:[%s4] sm:$0x1]
    %v266 = vlaneseq
    %v267 = vshrl.u32 %v266, 7
    %v268 = vsub.s32 0, %v267
    %v269 = vrot.slane %v264, %v268
    %v287 = vunpack.c.l.b16 %v248
    %v288 = vunpack.c.l.b16 %v249
    %v289 = vunpack.c.l.b16 %v250
    %v290 = vunpack.c.l.b16 %v251
    %v291 = vunpack.c.l.b16 %v252
    %v292 = vunpack.c.l.b16 %v253
    %v293 = vunpack.c.l.b16 %v254
    %v294 = vunpack.c.l.b16 %v255
    %v295 = vunpack.c.l.b16 %v256
    %v296 = vunpack.c.l.b16 %v257
    %v297 = vunpack.c.l.b16 %v258
    %v298 = vunpack.c.l.b16 %v259
    %v299 = vunpack.c.l.b16 %v260
    %v300 = vunpack.c.l.b16 %v261
    %v301 = vunpack.c.l.b16 %v262
    %v302 = vunpack.c.l.b16 %v263
    %v303 = vpack.c.b16 %v288, %v287
    %v304 = vpack.c.b16 %v290, %v289
    %v305 = vpack.c.b16 %v292, %v291
    %v306 = vpack.c.b16 %v294, %v293
    %v307 = vpack.c.b16 %v296, %v295
    %v308 = vpack.c.b16 %v298, %v297
    %v309 = vpack.c.b16 %v300, %v299
    %v310 = vpack.c.b16 %v302, %v301
    %319 = vmatprep.subr.bf16.mxu0 0
    %320 = vmatpush1.bf16.msra.mxu0 %v310
    %321 = vmatprep.subr.bf16.mxu0 0
    %322 = vmatpush1.bf16.msra.mxu0 %v309
    %323 = vmatprep.subr.bf16.mxu0 0
    %324 = vmatpush1.bf16.msra.mxu0 %v308
    %325 = vmatprep.subr.bf16.mxu0 0
    %326 = vmatpush1.bf16.msra.mxu0 %v307
    %327 = vmatprep.subr.bf16.mxu0 0
    %328 = vmatpush1.bf16.msra.mxu0 %v306
    %329 = vmatprep.subr.bf16.mxu0 0
    %330 = vmatpush1.bf16.msra.mxu0 %v305
    %331 = vmatprep.subr.bf16.mxu0 0
    %332 = vmatpush1.bf16.msra.mxu0 %v304
    %333 = vmatprep.subr.bf16.mxu0 0
    %334 = vmatpush1.bf16.msra.mxu0 %v303
    %335 = vmatprep.subr.bf16.mxu0 0
    %336 = vmatpush2.bf16.msra.mxu0 0
    %337 = vmatprep.subr.bf16.mxu0 0
    %338 = vmatpush2.bf16.msra.mxu0 0
    %339 = vmatprep.subr.bf16.mxu0 0
    %340 = vmatpush2.bf16.msra.mxu0 0
    %341 = vmatprep.subr.bf16.mxu0 0
    %342 = vmatpush2.bf16.msra.mxu0 0
    %343 = vmatprep.subr.bf16.mxu0 0
    %344 = vmatpush2.bf16.msra.mxu0 0
    %345 = vmatprep.subr.bf16.mxu0 0
    %346 = vmatpush2.bf16.msra.mxu0 0
    %347 = vmatprep.subr.bf16.mxu0 0
    %348 = vmatpush2.bf16.msra.mxu0 0
    %349 = vmatprep.subr.bf16.mxu0 0
    %350 = vmatpush2.bf16.msra.mxu0 0
    %351 = vmatprep.mubr.bf16.mxu0 0
    %352 = vmatmul.mubr.bf16.gmra.mxu0 %v247
    %v353 = vpop.f32.mrf.mxu0
    %v354 = vadd.f32 %v269, %v353
    %v355 = vpop.f32.mrf.mxu0
    %v356 = vpop.f32.mrf.mxu0
    %v357 = vpop.f32.mrf.mxu0
    %358 = vdwg.mxu0
    %v359 = vmax.f32 %v354, 0.0
    %v360 = vlaneseq
    %v361 = vand.u32 %v360, 127
    %vm362 = vcmp.lt.s32.totalorder %v361, 64
    %v363 = vsel %vm362, 1, 0
    %v364 = vcvt.s32.f32 %v363
    %v365 = vmul.f32 %v359, %v364
    %366 = vadd.xlane.f32.xlu0 %v365
    %v367 = vpop.xlane.xlu0 %366
    %v368 = vmul.f32 %v367, 0.015625
    %v369 = vsub.f32 %v359, %v368
    %v370 = vmul.f32 %v369, %v364
    %v371 = vmul.f32 %v370, %v370
    %372 = vadd.xlane.f32.xlu0 %v371
    %v373 = vpop.xlane.xlu0 %372
    %v374 = vmul.f32 %v373, 0.015625
    %v375 = vadd.f32 %v374, 1e-05
    %v376 = vrsqrt.pop %v375
    %v377 = vmul.f32 %v370, %v376
    %v378 = vld [vmem:[%s5] sm:$0x1]
    %v380 = vlaneseq
    %v381 = vshrl.u32 %v380, 7
    %v382 = vsub.s32 0, %v381
    %v383 = vrot.slane %v378, %v382
    %v385 = vmul.f32 %v377, %v383
    %v386 = vld [vmem:[%s6] sm:$0x1]
    %v388 = vlaneseq
    %v389 = vshrl.u32 %v388, 7
    %v390 = vsub.s32 0, %v389
    %v391 = vrot.slane %v386, %v390
    %v393 = vadd.f32 %v385, %v391
    %394 = vst [vmem:[#allocation8] sm:$0xff] %v393
    // Predicated region
    $region42: #{tpu_custom_call.1} parent=1 // pred_check
      _
    $region43: #{tpu_custom_call.1} parent=1 // pred_check_branch
      %396 = sbr.rel (0) target = $region45
    $region44: #{tpu_custom_call.1} parent=1 // pred_region
      %s398 = ssub.s32 128, 128
      %399 = vsyncadd [#allocation4], %s398
      %s401 = sshll.u32 [#allocation8], 4
      %s402 = int_to_ptr.vmem [resolvable:$true] %s401
      %404 = dma.vmem_to_hbm [thread:$0]  %s402, 128, %s7, [#allocation4]
    $region45: #{tpu_custom_call.1} parent=1 // pred_fallthru
      _
    // Predicated region
    $region46: #{tpu_custom_call.1} parent=1 // pred_check
      _
    $region47: #{tpu_custom_call.1} parent=1 // pred_check_branch
      %406 = sbr.rel (0) target = $region49
    $region48: #{tpu_custom_call.1} parent=1 // pred_region
      %407 = dma.done [#allocation4], 128
    $region49: #{tpu_custom_call.1} parent=1 // pred_fallthru
      _
    %408 = vsyncpa [#allocation3], 1
    %409 = vsyncpa [#allocation6], 1
    %410 = vsyncpa [#allocation4], 1

</llo_original>
